<compile_context>
chip_gen: v6e
topology: v6e:2x2x1
jax: 0.10.0
libtpu: 0.0.40
codegen_flags: <defaults>
</compile_context>

<pallas_src>
import jax
import jax.numpy as jnp
from jax.experimental import pallas as pl
from jax.experimental.pallas import tpu as pltpu


# ---------------------------------------------------------------------------
# Kernel: numerically-stable softplus + clamp, elementwise on one (br, G) tile.
# softplus(x) = max(x, 0) + log1p(exp(-|x|))  (stable for large |x|, matches
# torch.nn.functional.softplus to f32 precision).
# ---------------------------------------------------------------------------
def _dispact_kernel(x_ref, o_ref):
    x = x_ref[...].astype(jnp.float32)
    sp = jnp.maximum(x, 0.0) + jnp.log1p(jnp.exp(-jnp.abs(x)))
    y = jnp.clip(sp, jnp.float32(1e-4), jnp.float32(1e4))
    o_ref[...] = y.astype(o_ref.dtype)


# ---------------------------------------------------------------------------
# Wrapper
# ---------------------------------------------------------------------------
def _choose_block_rows(n_rows, n_cols, itemsize):
    """Pick a row-tile size: big enough to amortize per-step overhead, small
    enough that (in + out) x double-buffering stays well inside scoped VMEM."""
    # ~4 MiB per tile buffer target -> <= ~16 MiB total with double buffering.
    target_bytes = 4 * 1024 * 1024
    br = target_bytes // max(1, n_cols * max(itemsize, 4))
    br = max(8, (int(br) // 8) * 8)        # multiple of 8 sublanes
    br = min(br, 1024)                      # diminishing returns past this
    padded_rows = ((n_rows + 7) // 8) * 8
    return min(br, padded_rows)


def disp_act(x):
    """Pallas TPU equivalent of DispAct.forward: clamp(softplus(x), 1e-4, 1e4)."""
    orig_shape = x.shape
    orig_dtype = x.dtype

    # Collapse to 2-D (rows, lanes); keep the last dim as the lane axis so the
    # output tiles are lane-dense (full-width blocks).
    if x.ndim == 0:
        x2 = x.reshape(1, 1)
    elif x.ndim == 1:
        x2 = x.reshape(1, -1)
    else:
        x2 = x.reshape(-1, orig_shape[-1])

    n_rows, n_cols = x2.shape
    br = _choose_block_rows(n_rows, n_cols, jnp.dtype(orig_dtype).itemsize)

    # Pad rows up to a multiple of the row tile (remainder handling; padded
    # rows are computed then sliced away — cheap and always correct).
    n_pad = ((n_rows + br - 1) // br) * br
    if n_pad != n_rows:
        x2 = jnp.pad(x2, ((0, n_pad - n_rows), (0, 0)))

    out = pl.pallas_call(
        _dispact_kernel,
        out_shape=jax.ShapeDtypeStruct((n_pad, n_cols), orig_dtype),
        grid_spec=pltpu.PrefetchScalarGridSpec(
            num_scalar_prefetch=0,
            grid=(n_pad // br,),
            in_specs=[pl.BlockSpec((br, n_cols), lambda i: (i, 0))],
            out_specs=pl.BlockSpec((br, n_cols), lambda i: (i, 0)),
        ),
        compiler_params=pltpu.CompilerParams(
            dimension_semantics=("parallel",),
            vmem_limit_bytes=32 * 1024 * 1024,
        ),
    )(x2)

    if n_pad != n_rows:
        out = out[:n_rows]
    return out.reshape(orig_shape)


# ---------------------------------------------------------------------------
# Pure-JAX reference (mirrors the PyTorch forward exactly)
# ---------------------------------------------------------------------------
def disp_act_ref(x):
    return jnp.clip(jax.nn.softplus(x.astype(jnp.float32)), 1e-4, 1e4).astype(x.dtype)


if __name__ == "__main__":
    key = jax.random.PRNGKey(0)
    k1, k2 = jax.random.split(key)

    # Small 2-D case (typical DispAct input: (cells, genes)), tile-aligned.
    x_a = 3.0 * jax.random.normal(k1, (16, 256), dtype=jnp.float32)
    out_a = jax.block_until_ready(disp_act(x_a))
    ref_a = disp_act_ref(x_a)
    assert out_a.shape == x_a.shape
    assert bool(jnp.all(jnp.isfinite(out_a)))
    assert jnp.allclose(out_a, ref_a, rtol=1e-5, atol=1e-6), (
        float(jnp.max(jnp.abs(out_a - ref_a))))

    # Non-divisible row count + 3-D shape exercises the padding/reshape path.
    x_b = 4.0 * jax.random.normal(k2, (2, 7, 160), dtype=jnp.float32) - 1.0
    out_b = jax.block_until_ready(disp_act(x_b))
    ref_b = disp_act_ref(x_b)
    assert out_b.shape == x_b.shape
    assert jnp.allclose(out_b, ref_b, rtol=1e-5, atol=1e-6), (
        float(jnp.max(jnp.abs(out_b - ref_b))))

    print("KERNEL_OK")
</pallas_src>

<mosaic_0001>
module attributes {stable_mosaic.version = 11 : i64} {
  func.func @_dispact_kernel(%arg0: i32, %arg1: memref<16x256xf32, #tpu.memory_space<vmem>>, %arg2: memref<16x256xf32, #tpu.memory_space<vmem>>) attributes {dimension_semantics = [#tpu.dimension_semantics<parallel>], iteration_bounds = array<i64: 1>, scalar_prefetch = 0 : i64, scratch_operands = 0 : i64, tpu.core_type = #tpu.core_type<tc>, window_params = [{transform_indices = @transform_0, window_bounds = array<i64: 16, 256>}, {transform_indices = @transform_1, window_bounds = array<i64: 16, 256>}]} {
    %c0 = arith.constant 0 : index
    %c0_0 = arith.constant 0 : index
    %0 = vector.load %arg1[%c0, %c0_0] : memref<16x256xf32, #tpu.memory_space<vmem>>, vector<16x256xf32>
    %cst = arith.constant 0.000000e+00 : f32
    %1 = vector.broadcast %cst : f32 to vector<16x256xf32>
    %2 = arith.maximumf %0, %1 : vector<16x256xf32>
    %3 = math.absf %0 : vector<16x256xf32>
    %cst_1 = arith.constant 0.000000e+00 : f32
    %4 = vector.broadcast %cst_1 : f32 to vector<16x256xf32>
    %5 = arith.subf %4, %3 : vector<16x256xf32>
    %6 = math.exp %5 : vector<16x256xf32>
    %7 = math.log1p %6 : vector<16x256xf32>
    %8 = arith.addf %2, %7 : vector<16x256xf32>
    %cst_2 = arith.constant 9.99999974E-5 : f32
    %cst_3 = arith.constant 1.000000e+04 : f32
    %9 = vector.broadcast %cst_2 : f32 to vector<16x256xf32>
    %10 = arith.maximumf %9, %8 : vector<16x256xf32>
    %11 = vector.broadcast %cst_3 : f32 to vector<16x256xf32>
    %12 = arith.minimumf %11, %10 : vector<16x256xf32>
    %c0_4 = arith.constant 0 : index
    %c0_5 = arith.constant 0 : index
    %13 = vector.load %arg2[%c0_4, %c0_5] : memref<16x256xf32, #tpu.memory_space<vmem>>, vector<16x256xf32>
    tpu.vector_store %arg2[%c0_4, %c0_5], %12 {strides = array<i32>} : memref<16x256xf32, #tpu.memory_space<vmem>>, vector<16x256xf32>,
    return
  }
  func.func @transform_0(%arg0: i32) -> (i32, i32) {
    %c0_i32 = arith.constant 0 : i32
    %c0_i32_0 = arith.constant 0 : i32
    return %arg0, %c0_i32 : i32, i32
  }
  func.func @transform_1(%arg0: i32) -> (i32, i32) {
    %c0_i32 = arith.constant 0 : i32
    %c0_i32_0 = arith.constant 0 : i32
    return %arg0, %c0_i32 : i32, i32
  }
}

</mosaic_0001>

<llo_original>
// kernel: tpu_custom_call.1
$region0: #{tpu_custom_call.1}
  #allocation0 [shape = 'u32[]', space=smem, size = 0x4, offset = 0x4, fixed_abs, tag = 'smem constant byte address 0x4 - core index']
  #allocation1 [shape = 'u32[144,128]{1,0:T(1,128)}', space=vmem, size = 0x12000, scoped, tag = 'internal scratch']
  %s0 = inlined_call_operand.hbm [shape: f32[16,256], index: 0, kind: input, shape index: {}]
  %s1 = inlined_call_operand.hbm [shape: f32[16,256], index: 1, kind: output, shape index: {}]
  %s2 = sld [smem:[#allocation0]]
  $region18: #{tpu_custom_call.1} parent=0
    _
  %s4 = ssub.s32 1, %s2
  %s5 = scalar_select 0, %s4, %s2
  $region1: #{tpu_custom_call.1} parent=0
    #allocation2 [shape = 'u8[16384]{0}', space=vmem, size = 0x4000, scoped, tag = 'input window, operand 0, single buffered']
    #allocation3 [shape = 's32[1]{0}', space=sflag, size = 0x4, scoped, tag = 'scoped memory for tpu_custom_call.1']
    #allocation4 [shape = 's32[1]{0}', space=sflag, size = 0x4, scoped, tag = 'scoped memory for tpu_custom_call.1']
    #allocation5 [shape = 'u8[16384]{0}', space=vmem, size = 0x4000, scoped, tag = 'output window, operand 0, single buffered']
    %6 = vsyncpa [#allocation3], 0
    %7 = vsyncpa [#allocation4], 0
    // Predicated region
    $region2: #{tpu_custom_call.1} parent=1 // pred_check
      _
    $region3: #{tpu_custom_call.1} parent=1 // pred_check_branch
      %9 = sbr.rel (0) target = $region5
    $region4: #{tpu_custom_call.1} parent=1 // pred_region
      %s11 = ssub.s32 512, 512
      %12 = vsyncadd [#allocation3], %s11
      %s13 = sshll.u32 [#allocation2], 4
      %s14 = int_to_ptr.vmem [resolvable:$true] %s13
      %19 = dma.hbm_to_vmem [thread:$0]  %s0, 512, %s14, [#allocation3], 256, 256, 16
    $region5: #{tpu_custom_call.1} parent=1 // pred_fallthru
      _
    // Predicated region
    $region6: #{tpu_custom_call.1} parent=1 // pred_check
      _
    $region7: #{tpu_custom_call.1} parent=1 // pred_check_branch
      %21 = sbr.rel (0) target = $region9
    $region8: #{tpu_custom_call.1} parent=1 // pred_region
      %22 = dma.done [#allocation3], 512
    $region9: #{tpu_custom_call.1} parent=1 // pred_fallthru
      _
    %v23 = vld [vmem:[#allocation2] sm:$0xff]
    %v24 = vld [vmem:[#allocation2 + $0x8] sm:$0xff]
    %v25 = vld [vmem:[#allocation2 + $0x10] sm:$0xff]
    %v26 = vld [vmem:[#allocation2 + $0x18] sm:$0xff]
    %v27 = vmax.f32 %v23, 0.0
    %v28 = vmax.f32 %v24, 0.0
    %v29 = vmax.f32 %v25, 0.0
    %v30 = vmax.f32 %v26, 0.0
    %v31 = vand.u32 2147483647, %v23
    %v32 = vand.u32 2147483647, %v24
    %v33 = vand.u32 2147483647, %v25
    %v34 = vand.u32 2147483647, %v26
    %v35 = vsub.f32 0.0, %v31
    %v36 = vsub.f32 0.0, %v32
    %v37 = vsub.f32 0.0, %v33
    %v38 = vsub.f32 0.0, %v34
    %v39 = vmul.f32 %v35, 1.442695
    %v40 = vpow.pop %v39
    %v41 = vmul.f32 %v36, 1.442695
    %v42 = vpow.pop %v41
    %v43 = vmul.f32 %v37, 1.442695
    %v44 = vpow.pop %v43
    %v45 = vmul.f32 %v38, 1.442695
    %v46 = vpow.pop %v45
    %v47 = vadd.f32 %v40, 1.0
    %v48 = vlog2.pop %v47
    %v49 = vmul.f32 %v48, 0.6931472
    %v50 = vmul.f32 -0.5, %v40
    %v51 = vadd.f32 %v50, 1.0
    %v52 = vmul.f32 %v51, %v40
    %v53 = vand.u32 2147483647, %v40
    %vm54 = vcmp.lt.f32.partialorder %v53, 0.0004427343
    %v55 = vsel %vm54, %v52, %v49
    %v56 = vadd.f32 %v42, 1.0
    %v57 = vlog2.pop %v56
    %v58 = vmul.f32 %v57, 0.6931472
    %v59 = vmul.f32 -0.5, %v42
    %v60 = vadd.f32 %v59, 1.0
    %v61 = vmul.f32 %v60, %v42
    %v62 = vand.u32 2147483647, %v42
    %vm63 = vcmp.lt.f32.partialorder %v62, 0.0004427343
    %v64 = vsel %vm63, %v61, %v58
    %v65 = vadd.f32 %v44, 1.0
    %v66 = vlog2.pop %v65
    %v67 = vmul.f32 %v66, 0.6931472
    %v68 = vmul.f32 -0.5, %v44
    %v69 = vadd.f32 %v68, 1.0
    %v70 = vmul.f32 %v69, %v44
    %v71 = vand.u32 2147483647, %v44
    %vm72 = vcmp.lt.f32.partialorder %v71, 0.0004427343
    %v73 = vsel %vm72, %v70, %v67
    %v74 = vadd.f32 %v46, 1.0
    %v75 = vlog2.pop %v74
    %v76 = vmul.f32 %v75, 0.6931472
    %v77 = vmul.f32 -0.5, %v46
    %v78 = vadd.f32 %v77, 1.0
    %v79 = vmul.f32 %v78, %v46
    %v80 = vand.u32 2147483647, %v46
    %vm81 = vcmp.lt.f32.partialorder %v80, 0.0004427343
    %v82 = vsel %vm81, %v79, %v76
    %v83 = vadd.f32 %v27, %v55
    %v84 = vadd.f32 %v28, %v64
    %v85 = vadd.f32 %v29, %v73
    %v86 = vadd.f32 %v30, %v82
    %v87 = vmax.f32 %v83, 0.0001
    %v88 = vmax.f32 %v84, 0.0001
    %v89 = vmax.f32 %v85, 0.0001
    %v90 = vmax.f32 %v86, 0.0001
    %v91 = vmin.f32 %v87, 10000.0
    %v92 = vmin.f32 %v88, 10000.0
    %v93 = vmin.f32 %v89, 10000.0
    %v94 = vmin.f32 %v90, 10000.0
    %95 = vst [vmem:[#allocation5] sm:$0xff] %v91
    %96 = vst [vmem:[#allocation5 + $0x8] sm:$0xff] %v92
    %97 = vst [vmem:[#allocation5 + $0x10] sm:$0xff] %v93
    %98 = vst [vmem:[#allocation5 + $0x18] sm:$0xff] %v94
    // Predicated region
    $region10: #{tpu_custom_call.1} parent=1 // pred_check
      _
    $region11: #{tpu_custom_call.1} parent=1 // pred_check_branch
      %100 = sbr.rel (0) target = $region13
    $region12: #{tpu_custom_call.1} parent=1 // pred_region
      %s102 = ssub.s32 512, 512
      %103 = vsyncadd [#allocation4], %s102
      %s104 = sshll.u32 [#allocation5], 4
      %s105 = int_to_ptr.vmem [resolvable:$true] %s104
      %110 = dma.vmem_to_hbm [thread:$0]  %s105, 512, %s1, [#allocation4], 256, 256, 16
    $region13: #{tpu_custom_call.1} parent=1 // pred_fallthru
      _
    // Predicated region
    $region14: #{tpu_custom_call.1} parent=1 // pred_check
      _
    $region15: #{tpu_custom_call.1} parent=1 // pred_check_branch
      %112 = sbr.rel (0) target = $region17
    $region16: #{tpu_custom_call.1} parent=1 // pred_region
      %113 = dma.done [#allocation4], 512
    $region17: #{tpu_custom_call.1} parent=1 // pred_fallthru
      _
    %114 = vsyncpa [#allocation3], 1
    %115 = vsyncpa [#allocation4], 1

</llo_original>
